<compile_context>
chip_gen: v7x
topology: tpu7x:2x2x1
jax: 0.10.0
libtpu: 0.0.40
codegen_flags: <defaults>
</compile_context>

<pallas_src>
import functools
import math

import jax
import jax.numpy as jnp
import numpy as np
from jax import lax
from jax.experimental import pallas as pl
from jax.experimental.pallas import tpu as pltpu

TEMPERATURE = 0.5
NORM_EPS = 1e-12                  # torch.nn.functional.normalize eps
_NORM_EPS_SQ = NORM_EPS * NORM_EPS


def _sup_moco_kernel(x0r_ref, x1r_ref, y0_ref, y1_ref,
                     labr_ref, labc_ref, valid_ref, pos_ref,
                     out_ref, s01_sc, s10_sc, *, lse_max, negate):
    """One (row-block i, column-block j) step.

    Tiles are TRANSPOSED: logit tile t[n, m] = column n . row m, shape (TN, TM),
    so the per-row reduction is over the sublane axis and all per-row state is
    lane-dense (1, TM).
    """
    j = pl.program_id(1)
    n_j = pl.num_programs(1)
    m = jnp.float32(lse_max)

    # ---- per row-block init (first column block): seed exp-sums with the
    # positive term (the positive logit was computed wrapper-side in f32). ----
    @pl.when(j == 0)
    def _():
        e_pos = jnp.exp(pos_ref[...] - m)          # (1, TM)
        s01_sc[...] = e_pos
        s10_sc[...] = e_pos

    # Negatives mask for this tile: different label AND a real (non-pad) column.
    neg = jnp.logical_and(labc_ref[...] != labr_ref[...],     # (TN, 1) vs (1, TM)
                          valid_ref[...] != 0)                # (TN, 1) broadcast

    x0r = x0r_ref[...]        # (TM, D) bf16, pre-normalized, scaled by 1/sqrt|T|
    x1r = x1r_ref[...]
    y0 = y0_ref[...]          # (TN, D) bf16 column tiles
    y1 = y1_ref[...]

    def logits(col, row):
        t = jnp.einsum("nd,md->nm", col, row,
                       preferred_element_type=jnp.float32)    # (TN, TM) f32
        return -t if negate else t        # trace-time sign of the temperature

    # loss_01 terms: logits_01^T (y1 . x0r^T) and logits_00^T (y0 . x0r^T).
    # Both matmuls share the x0r operand -> back-to-back for MXU operand reuse.
    t01 = logits(y1, x0r)
    t00 = logits(y0, x0r)
    e01 = jnp.exp(t01 - m) + jnp.exp(t00 - m)
    s01_sc[...] += jnp.sum(jnp.where(neg, e01, 0.0), axis=0, keepdims=True)

    # loss_10 terms: logits_10^T (y0 . x1r^T) and logits_11^T (y1 . x1r^T);
    # share x1r.
    t10 = logits(y0, x1r)
    t11 = logits(y1, x1r)
    e10 = jnp.exp(t10 - m) + jnp.exp(t11 - m)
    s10_sc[...] += jnp.sum(jnp.where(neg, e10, 0.0), axis=0, keepdims=True)

    # ---- finalize: per-row cross entropy (target = positive), loss_01 + loss_10.
    @pl.when(j == n_j - 1)
    def _():
        pos = pos_ref[...]
        out_ref[...] = ((m + jnp.log(s01_sc[...]) - pos) +
                        (m + jnp.log(s10_sc[...]) - pos))


def _round_up(x, m):
    return ((x + m - 1) // m) * m


def _choose_tiles(B, block_rows, block_cols):
    """Pick (TM row block, TN column block, padded batch Bp)."""
    assert block_rows % 128 == 0 and block_cols % 128 == 0
    bp0 = _round_up(B, 128)
    # Keep >= 2 row blocks when the batch permits so the "parallel" grid axis
    # actually shards across v7x's two TensorCores.
    half = max(128, (bp0 // 2) // 128 * 128)
    tm = min(block_rows, half)
    bp = _round_up(B, tm)
    tn = block_cols if tm % block_cols == 0 else 128   # TN | TM  =>  TN | Bp
    return tm, tn, bp


def _vmem_limit_bytes(tm, tn, d):
    bf16 = 2
    inputs = 2 * (2 * tm * d * bf16) + 2 * (2 * tn * d * bf16)   # double-buffered
    logit_tmp = 6 * tn * tm * 4                                  # f32 tile headroom
    scratch = 2 * tm * 4 + 8 * (tm + tn) * 4
    need = inputs + logit_tmp + scratch + (4 << 20)
    return int(min(max(need, 32 << 20), 64 << 20))               # safe on all gens


def sup_moco_loss(out0, out1, labels, *, temperature=TEMPERATURE,
                  block_rows=512, block_cols=256):
    """Supervised MoCo / NT-Xent loss (in-batch negatives path).

    out0, out1: (B, D) float; labels: (B,) int.  Returns scalar float32 loss.
    """
    B, D = out0.shape
    assert out1.shape == (B, D)
    assert abs(temperature) >= 1e-8

    # ---- one-pass wrapper-side prep (f32): F.normalize, temperature fold,
    # positive logit, bf16 cast.  Done once; the kernel only streams bf16. ----
    x0 = out0.astype(jnp.float32)
    x1 = out1.astype(jnp.float32)
    eps_sq = jnp.float32(_NORM_EPS_SQ)
    x0n = x0 * lax.rsqrt(jnp.maximum(jnp.sum(x0 * x0, axis=1, keepdims=True), eps_sq))
    x1n = x1 * lax.rsqrt(jnp.maximum(jnp.sum(x1 * x1, axis=1, keepdims=True), eps_sq))
    pos = jnp.sum(x0n * x1n, axis=1) / jnp.float32(temperature)   # (B,) f32, signed
    scale = jnp.float32(1.0 / math.sqrt(abs(temperature)))
    x0b = (x0n * scale).astype(jnp.bfloat16)
    x1b = (x1n * scale).astype(jnp.bfloat16)

    TM, TN, Bp = _choose_tiles(B, block_rows, block_cols)
    pad = Bp - B

    labels = labels.astype(jnp.int32)
    if pad:
        x0b = jnp.pad(x0b, ((0, pad), (0, 0)))
        x1b = jnp.pad(x1b, ((0, pad), (0, 0)))
        labels = jnp.pad(labels, (0, pad))
        pos = jnp.pad(pos, (0, pad))
    lab_row = labels.reshape(1, Bp)                                   # (1, Bp)
    lab_col = labels.reshape(Bp, 1)                                   # (Bp, 1)
    valid_col = (jnp.arange(Bp, dtype=jnp.int32) < B).astype(jnp.int32).reshape(Bp, 1)
    pos_row = pos.reshape(1, Bp).astype(jnp.float32)

    kernel = functools.partial(_sup_moco_kernel,
                               lse_max=1.0 / abs(temperature),
                               negate=(temperature < 0))

    per_row = pl.pallas_call(
        kernel,
        out_shape=jax.ShapeDtypeStruct((1, Bp), jnp.float32),
        grid_spec=pltpu.PrefetchScalarGridSpec(
            num_scalar_prefetch=0,
            grid=(Bp // TM, Bp // TN),
            in_specs=[
                pl.BlockSpec((TM, D), lambda i, j: (i, 0)),   # x0 row tile (bf16)
                pl.BlockSpec((TM, D), lambda i, j: (i, 0)),   # x1 row tile (bf16)
                pl.BlockSpec((TN, D), lambda i, j: (j, 0)),   # x0 column tile (bf16)
                pl.BlockSpec((TN, D), lambda i, j: (j, 0)),   # x1 column tile (bf16)
                pl.BlockSpec((1, TM), lambda i, j: (0, i)),   # labels (row side)
                pl.BlockSpec((TN, 1), lambda i, j: (j, 0)),   # labels (column side)
                pl.BlockSpec((TN, 1), lambda i, j: (j, 0)),   # column validity (pad)
                pl.BlockSpec((1, TM), lambda i, j: (0, i)),   # positive logits (f32)
            ],
            out_specs=pl.BlockSpec((1, TM), lambda i, j: (0, i)),
            scratch_shapes=[
                pltpu.VMEM((1, TM), jnp.float32),    # exp-sum accumulator loss_01
                pltpu.VMEM((1, TM), jnp.float32),    # exp-sum accumulator loss_10
            ],
        ),
        compiler_params=pltpu.CompilerParams(
            dimension_semantics=("parallel", "arbitrary"),
            vmem_limit_bytes=_vmem_limit_bytes(TM, TN, D)),
    )(x0b, x1b, x0b, x1b, lab_row, lab_col, valid_col, pos_row)

    return jnp.sum(per_row[0, :B]) / B


def _torch_style_reference(out0, out1, labels, temperature):
    """Numpy transcription of the PyTorch forward (memory bank size 0 path)."""
    out0 = np.asarray(out0, np.float64)
    out1 = np.asarray(out1, np.float64)
    labels = np.asarray(labels)
    B = out0.shape[0]
    out0 = out0 / np.maximum(np.linalg.norm(out0, axis=1, keepdims=True), NORM_EPS)
    out1 = out1 / np.maximum(np.linalg.norm(out1, axis=1, keepdims=True), NORM_EPS)
    l00 = out0 @ out0.T / temperature
    l01 = out0 @ out1.T / temperature
    l10 = out1 @ out0.T / temperature
    l11 = out1 @ out1.T / temperature
    accum = 0.0
    for idx in range(B):
        neg = labels != labels[idx]

        def ce(sim_pos, cur_pos_row, cur_extra_row):
            logits = np.concatenate([[sim_pos], cur_pos_row[neg], cur_extra_row[neg]])
            m = logits.max()
            return (m + np.log(np.sum(np.exp(logits - m)))) - logits[0]

        accum += ce(l01[idx, idx], l01[idx], l00[idx])
        accum += ce(l10[idx, idx], l10[idx], l11[idx])
    return accum / B


if __name__ == "__main__":
    root = jax.random.PRNGKey(0)

    def run_case(case_id, B, D, temperature=TEMPERATURE, num_classes=3):
        k0, k1, k2 = jax.random.split(jax.random.fold_in(root, case_id), 3)
        out0 = jax.random.normal(k0, (B, D), dtype=jnp.float32)
        out1 = jax.random.normal(k1, (B, D), dtype=jnp.float32)
        labels = jax.random.randint(k2, (B,), 0, num_classes, dtype=jnp.int32)
        loss = jax.block_until_ready(
            sup_moco_loss(out0, out1, labels, temperature=temperature))
        ref = _torch_style_reference(np.array(out0), np.array(out1),
                                     np.array(labels), temperature)
        # bf16 MXU operands (f32 accumulation) -> slightly looser tolerance than f32.
        assert np.allclose(float(loss), ref, rtol=2e-2, atol=3e-2), \
            (B, D, temperature, float(loss), ref)

    run_case(0, 8, 32)                      # single-tile path (small module shapes)
    run_case(1, 300, 64)                    # multi-block grid, row/col padding (Bp=384)
    run_case(2, 16, 16, temperature=-0.5)   # negative-temperature sign path
    print("KERNEL_OK")
</pallas_src>

<mosaic_0001>
module attributes {stable_mosaic.version = 11 : i64} {
  func.func @_sup_moco_kernel(%arg0: i32, %arg1: i32, %arg2: memref<128x32xbf16, #tpu.memory_space<vmem>>, %arg3: memref<128x32xbf16, #tpu.memory_space<vmem>>, %arg4: memref<128x32xbf16, #tpu.memory_space<vmem>>, %arg5: memref<128x32xbf16, #tpu.memory_space<vmem>>, %arg6: memref<1x128xi32, #tpu.memory_space<vmem>>, %arg7: memref<128x1xi32, #tpu.memory_space<vmem>>, %arg8: memref<128x1xi32, #tpu.memory_space<vmem>>, %arg9: memref<1x128xf32, #tpu.memory_space<vmem>>, %arg10: memref<1x128xf32, #tpu.memory_space<vmem>>, %arg11: memref<1x128xf32, #tpu.memory_space<vmem>>, %arg12: memref<1x128xf32, #tpu.memory_space<vmem>>) attributes {dimension_semantics = [#tpu.dimension_semantics<parallel>, #tpu.dimension_semantics<arbitrary>], iteration_bounds = array<i64: 1, 1>, scalar_prefetch = 0 : i64, scratch_operands = 2 : i64, tpu.core_type = #tpu.core_type<tc>, window_params = [{transform_indices = @transform_0, window_bounds = array<i64: 128, 32>}, {transform_indices = @transform_1, window_bounds = array<i64: 128, 32>}, {transform_indices = @transform_2, window_bounds = array<i64: 128, 32>}, {transform_indices = @transform_3, window_bounds = array<i64: 128, 32>}, {transform_indices = @transform_4, window_bounds = array<i64: 1, 128>}, {transform_indices = @transform_5, window_bounds = array<i64: 128, 1>}, {transform_indices = @transform_6, window_bounds = array<i64: 128, 1>}, {transform_indices = @transform_7, window_bounds = array<i64: 1, 128>}, {transform_indices = @transform_8, window_bounds = array<i64: 1, 128>}]} {
    %c0_i32 = arith.constant 0 : i32
    %0 = arith.cmpi eq, %arg1, %c0_i32 : i32
    %1 = arith.extui %0 : i1 to i32
    %cst = arith.constant 2.000000e+00 : f32
    %c0_i32_0 = arith.constant 0 : i32
    %2 = arith.cmpi ne, %1, %c0_i32_0 : i32
    scf.if %2 {
      %c0_38 = arith.constant 0 : index
      %c0_39 = arith.constant 0 : index
      %52 = vector.load %arg9[%c0_38, %c0_39] : memref<1x128xf32, #tpu.memory_space<vmem>>, vector<1x128xf32>
      %53 = vector.broadcast %cst : f32 to vector<1x128xf32>
      %54 = arith.subf %52, %53 : vector<1x128xf32>
      %55 = math.exp %54 : vector<1x128xf32>
      %c0_40 = arith.constant 0 : index
      %c0_41 = arith.constant 0 : index
      %56 = vector.load %arg11[%c0_40, %c0_41] : memref<1x128xf32, #tpu.memory_space<vmem>>, vector<1x128xf32>
      tpu.vector_store %arg11[%c0_40, %c0_41], %55 {strides = array<i32>} : memref<1x128xf32, #tpu.memory_space<vmem>>, vector<1x128xf32>,
      %c0_42 = arith.constant 0 : index
      %c0_43 = arith.constant 0 : index
      %57 = vector.load %arg12[%c0_42, %c0_43] : memref<1x128xf32, #tpu.memory_space<vmem>>, vector<1x128xf32>
      tpu.vector_store %arg12[%c0_42, %c0_43], %55 {strides = array<i32>} : memref<1x128xf32, #tpu.memory_space<vmem>>, vector<1x128xf32>,
    } else {
    }
    %c0 = arith.constant 0 : index
    %c0_1 = arith.constant 0 : index
    %3 = vector.load %arg7[%c0, %c0_1] : memref<128x1xi32, #tpu.memory_space<vmem>>, vector<128x1xi32>
    %c0_2 = arith.constant 0 : index
    %c0_3 = arith.constant 0 : index
    %4 = vector.load %arg6[%c0_2, %c0_3] : memref<1x128xi32, #tpu.memory_space<vmem>>, vector<1x128xi32>
    %5 = vector.broadcast %3 : vector<128x1xi32> to vector<128x128xi32>
    %6 = vector.broadcast %4 : vector<1x128xi32> to vector<128x128xi32>
    %7 = arith.cmpi ne, %5, %6 : vector<128x128xi32>
    %c0_4 = arith.constant 0 : index
    %c0_5 = arith.constant 0 : index
    %8 = vector.load %arg8[%c0_4, %c0_5] : memref<128x1xi32, #tpu.memory_space<vmem>>, vector<128x1xi32>
    %c0_i32_6 = arith.constant 0 : i32
    %9 = vector.broadcast %c0_i32_6 : i32 to vector<128x1xi32>
    %10 = arith.cmpi ne, %8, %9 : vector<128x1xi32>
    %11 = vector.broadcast %10 : vector<128x1xi1> to vector<128x128xi1>
    %12 = arith.andi %7, %11 : vector<128x128xi1>
    %c0_7 = arith.constant 0 : index
    %c0_8 = arith.constant 0 : index
    %13 = vector.load %arg2[%c0_7, %c0_8] : memref<128x32xbf16, #tpu.memory_space<vmem>>, vector<128x32xbf16>
    %c0_9 = arith.constant 0 : index
    %c0_10 = arith.constant 0 : index
    %14 = vector.load %arg3[%c0_9, %c0_10] : memref<128x32xbf16, #tpu.memory_space<vmem>>, vector<128x32xbf16>
    %c0_11 = arith.constant 0 : index
    %c0_12 = arith.constant 0 : index
    %15 = vector.load %arg4[%c0_11, %c0_12] : memref<128x32xbf16, #tpu.memory_space<vmem>>, vector<128x32xbf16>
    %c0_13 = arith.constant 0 : index
    %c0_14 = arith.constant 0 : index
    %16 = vector.load %arg5[%c0_13, %c0_14] : memref<128x32xbf16, #tpu.memory_space<vmem>>, vector<128x32xbf16>
    "tpu.trace_start"() <{level = 10 : i32, message = "nd,md->nm"}> : () -> ()
    %cst_15 = arith.constant dense<0.000000e+00> : vector<128x128xf32>
    %17 = tpu.matmul %16, %13, %cst_15 {dimension_numbers = #tpu.dot_dimension_numbers<[1], [1], [0], [0], [0, 0, 1, 0], [], []>} : vector<128x32xbf16>, vector<128x32xbf16>, vector<128x128xf32> -> vector<128x128xf32>
    %cst_16 = arith.constant dense<0.000000e+00> : vector<128x128xf32>
    %18 = tpu.matmul %15, %13, %cst_16 {dimension_numbers = #tpu.dot_dimension_numbers<[1], [1], [0], [0], [0, 0, 1, 0], [], []>} : vector<128x32xbf16>, vector<128x32xbf16>, vector<128x128xf32> -> vector<128x128xf32>
    "tpu.trace_stop"() : () -> ()
    %cst_17 = arith.constant 2.000000e+00 : f32
    %19 = vector.broadcast %cst_17 : f32 to vector<128x128xf32>
    %20 = arith.subf %17, %19 : vector<128x128xf32>
    %21 = math.exp %20 : vector<128x128xf32>
    %cst_18 = arith.constant 2.000000e+00 : f32
    %22 = vector.broadcast %cst_18 : f32 to vector<128x128xf32>
    %23 = arith.subf %18, %22 : vector<128x128xf32>
    %24 = math.exp %23 : vector<128x128xf32>
    %25 = arith.addf %21, %24 : vector<128x128xf32>
    %c0_19 = arith.constant 0 : index
    %c0_20 = arith.constant 0 : index
    %26 = vector.load %arg11[%c0_19, %c0_20] : memref<1x128xf32, #tpu.memory_space<vmem>>, vector<1x128xf32>
    %cst_21 = arith.constant 0.000000e+00 : f32
    %27 = vector.broadcast %cst_21 : f32 to vector<128x128xf32>
    %28 = arith.select %12, %25, %27 : vector<128x128xi1>, vector<128x128xf32>
    %cst_22 = arith.constant dense<0.000000e+00> : vector<128xf32>
    %29 = vector.multi_reduction <add>, %28, %cst_22 [0] : vector<128x128xf32> to vector<128xf32>
    %30 = vector.shape_cast %29 : vector<128xf32> to vector<1x128xf32>
    %31 = arith.addf %26, %30 : vector<1x128xf32>
    %c0_23 = arith.constant 0 : index
    %c0_24 = arith.constant 0 : index
    %32 = vector.load %arg11[%c0_23, %c0_24] : memref<1x128xf32, #tpu.memory_space<vmem>>, vector<1x128xf32>
    tpu.vector_store %arg11[%c0_23, %c0_24], %31 {strides = array<i32>} : memref<1x128xf32, #tpu.memory_space<vmem>>, vector<1x128xf32>,
    "tpu.trace_start"() <{level = 10 : i32, message = "nd,md->nm"}> : () -> ()
    %cst_25 = arith.constant dense<0.000000e+00> : vector<128x128xf32>
    %33 = tpu.matmul %15, %14, %cst_25 {dimension_numbers = #tpu.dot_dimension_numbers<[1], [1], [0], [0], [0, 0, 1, 0], [], []>} : vector<128x32xbf16>, vector<128x32xbf16>, vector<128x128xf32> -> vector<128x128xf32>
    %cst_26 = arith.constant dense<0.000000e+00> : vector<128x128xf32>
    %34 = tpu.matmul %16, %14, %cst_26 {dimension_numbers = #tpu.dot_dimension_numbers<[1], [1], [0], [0], [0, 0, 1, 0], [], []>} : vector<128x32xbf16>, vector<128x32xbf16>, vector<128x128xf32> -> vector<128x128xf32>
    "tpu.trace_stop"() : () -> ()
    %cst_27 = arith.constant 2.000000e+00 : f32
    %35 = vector.broadcast %cst_27 : f32 to vector<128x128xf32>
    %36 = arith.subf %33, %35 : vector<128x128xf32>
    %37 = math.exp %36 : vector<128x128xf32>
    %cst_28 = arith.constant 2.000000e+00 : f32
    %38 = vector.broadcast %cst_28 : f32 to vector<128x128xf32>
    %39 = arith.subf %34, %38 : vector<128x128xf32>
    %40 = math.exp %39 : vector<128x128xf32>
    %41 = arith.addf %37, %40 : vector<128x128xf32>
    %c0_29 = arith.constant 0 : index
    %c0_30 = arith.constant 0 : index
    %42 = vector.load %arg12[%c0_29, %c0_30] : memref<1x128xf32, #tpu.memory_space<vmem>>, vector<1x128xf32>
    %cst_31 = arith.constant 0.000000e+00 : f32
    %43 = vector.broadcast %cst_31 : f32 to vector<128x128xf32>
    %44 = arith.select %12, %41, %43 : vector<128x128xi1>, vector<128x128xf32>
    %cst_32 = arith.constant dense<0.000000e+00> : vector<128xf32>
    %45 = vector.multi_reduction <add>, %44, %cst_32 [0] : vector<128x128xf32> to vector<128xf32>
    %46 = vector.shape_cast %45 : vector<128xf32> to vector<1x128xf32>
    %47 = arith.addf %42, %46 : vector<1x128xf32>
    %c0_33 = arith.constant 0 : index
    %c0_34 = arith.constant 0 : index
    %48 = vector.load %arg12[%c0_33, %c0_34] : memref<1x128xf32, #tpu.memory_space<vmem>>, vector<1x128xf32>
    tpu.vector_store %arg12[%c0_33, %c0_34], %47 {strides = array<i32>} : memref<1x128xf32, #tpu.memory_space<vmem>>, vector<1x128xf32>,
    %c0_i32_35 = arith.constant 0 : i32
    %49 = arith.cmpi eq, %arg1, %c0_i32_35 : i32
    %50 = arith.extui %49 : i1 to i32
    %cst_36 = arith.constant 2.000000e+00 : f32
    %c0_i32_37 = arith.constant 0 : i32
    %51 = arith.cmpi ne, %50, %c0_i32_37 : i32
    scf.if %51 {
      %c0_38 = arith.constant 0 : index
      %c0_39 = arith.constant 0 : index
      %52 = vector.load %arg9[%c0_38, %c0_39] : memref<1x128xf32, #tpu.memory_space<vmem>>, vector<1x128xf32>
      %c0_40 = arith.constant 0 : index
      %c0_41 = arith.constant 0 : index
      %53 = vector.load %arg11[%c0_40, %c0_41] : memref<1x128xf32, #tpu.memory_space<vmem>>, vector<1x128xf32>
      %54 = math.log %53 : vector<1x128xf32>
      %55 = vector.broadcast %cst_36 : f32 to vector<1x128xf32>
      %56 = arith.addf %55, %54 : vector<1x128xf32>
      %57 = arith.subf %56, %52 : vector<1x128xf32>
      %c0_42 = arith.constant 0 : index
      %c0_43 = arith.constant 0 : index
      %58 = vector.load %arg12[%c0_42, %c0_43] : memref<1x128xf32, #tpu.memory_space<vmem>>, vector<1x128xf32>
      %59 = math.log %58 : vector<1x128xf32>
      %60 = vector.broadcast %cst_36 : f32 to vector<1x128xf32>
      %61 = arith.addf %60, %59 : vector<1x128xf32>
      %62 = arith.subf %61, %52 : vector<1x128xf32>
      %63 = arith.addf %57, %62 : vector<1x128xf32>
      %c0_44 = arith.constant 0 : index
      %c0_45 = arith.constant 0 : index
      %64 = vector.load %arg10[%c0_44, %c0_45] : memref<1x128xf32, #tpu.memory_space<vmem>>, vector<1x128xf32>
      tpu.vector_store %arg10[%c0_44, %c0_45], %63 {strides = array<i32>} : memref<1x128xf32, #tpu.memory_space<vmem>>, vector<1x128xf32>,
    } else {
    }
    return
  }
  func.func @transform_0(%arg0: i32, %arg1: i32) -> (i32, i32) {
    %c0_i32 = arith.constant 0 : i32
    %c0_i32_0 = arith.constant 0 : i32
    return %arg0, %c0_i32 : i32, i32
  }
  func.func @transform_1(%arg0: i32, %arg1: i32) -> (i32, i32) {
    %c0_i32 = arith.constant 0 : i32
    %c0_i32_0 = arith.constant 0 : i32
    return %arg0, %c0_i32 : i32, i32
  }
  func.func @transform_2(%arg0: i32, %arg1: i32) -> (i32, i32) {
    %c0_i32 = arith.constant 0 : i32
    %c0_i32_0 = arith.constant 0 : i32
    return %arg1, %c0_i32 : i32, i32
  }
  func.func @transform_3(%arg0: i32, %arg1: i32) -> (i32, i32) {
    %c0_i32 = arith.constant 0 : i32
    %c0_i32_0 = arith.constant 0 : i32
    return %arg1, %c0_i32 : i32, i32
  }
  func.func @transform_4(%arg0: i32, %arg1: i32) -> (i32, i32) {
    %c0_i32 = arith.constant 0 : i32
    %c0_i32_0 = arith.constant 0 : i32
    return %c0_i32, %arg0 : i32, i32
  }
  func.func @transform_5(%arg0: i32, %arg1: i32) -> (i32, i32) {
    %c0_i32 = arith.constant 0 : i32
    %c0_i32_0 = arith.constant 0 : i32
    return %arg1, %c0_i32 : i32, i32
  }
  func.func @transform_6(%arg0: i32, %arg1: i32) -> (i32, i32) {
    %c0_i32 = arith.constant 0 : i32
    %c0_i32_0 = arith.constant 0 : i32
    return %arg1, %c0_i32 : i32, i32
  }
  func.func @transform_7(%arg0: i32, %arg1: i32) -> (i32, i32) {
    %c0_i32 = arith.constant 0 : i32
    %c0_i32_0 = arith.constant 0 : i32
    return %c0_i32, %arg0 : i32, i32
  }
  func.func @transform_8(%arg0: i32, %arg1: i32) -> (i32, i32) {
    %c0_i32 = arith.constant 0 : i32
    %c0_i32_0 = arith.constant 0 : i32
    return %c0_i32, %arg0 : i32, i32
  }
}

</mosaic_0001>

<llo_original>
// kernel: tpu_custom_call.1
$region0: #{tpu_custom_call.1}
  #allocation0 [shape = 'u32[]', space=smem, size = 0x4, offset = 0x4, fixed_abs, tag = 'smem constant byte address 0x4 - core index']
  #allocation1 [shape = 'u32[144,128]{1,0:T(1,128)}', space=vmem, size = 0x12000, scoped, tag = 'internal scratch']
  #allocation2 [shape = 'f32[1,128]{1,0:T(1,128)}', space=vmem, size = 0x200, scoped, tag = 'scratch operand']
  #allocation3 [shape = 'f32[1,128]{1,0:T(1,128)}', space=vmem, size = 0x200, scoped, tag = 'scratch operand']
  %s0 = inlined_call_operand.vmem [shape: bf16[128,32], index: 0, kind: input, shape index: {}]
  %s1 = inlined_call_operand.vmem [shape: bf16[128,32], index: 1, kind: input, shape index: {}]
  %s2 = inlined_call_operand.vmem [shape: bf16[128,32], index: 2, kind: input, shape index: {}]
  %s3 = inlined_call_operand.vmem [shape: bf16[128,32], index: 3, kind: input, shape index: {}]
  %s4 = inlined_call_operand.vmem [shape: s32[1,128], index: 4, kind: input, shape index: {}]
  %s5 = inlined_call_operand.vmem [shape: s32[128,1], index: 5, kind: input, shape index: {}]
  %s6 = inlined_call_operand.vmem [shape: s32[128,1], index: 6, kind: input, shape index: {}]
  %s7 = inlined_call_operand.vmem [shape: f32[1,128], index: 7, kind: input, shape index: {}]
  %s8 = inlined_call_operand.hbm [shape: f32[1,128], index: 8, kind: output, shape index: {}]
  %s9 = sld [smem:[#allocation0]]
  $region50: #{tpu_custom_call.1} parent=0
    _
  %s11 = ssub.s32 1, %s9
  %s12 = scalar_select 0, %s11, %s9
  $region1: #{tpu_custom_call.1} parent=0
    #allocation4 [shape = 'u8[512]{0}', space=vmem, size = 0x400, scoped, tag = 'output window, operand 0, single buffered']
    #allocation5 [shape = 's32[1]{0}', space=sflag, size = 0x4, scoped, tag = 'scoped memory for tpu_custom_call.1']
    %13 = vsyncpa [#allocation5], 0
    // Predicated region
    $region2: #{tpu_custom_call.1} parent=1 // pred_check
      _
    $region3: #{tpu_custom_call.1} parent=1 // pred_check_branch
      %15 = sbr.rel (0) target = $region5
    $region4: #{tpu_custom_call.1} parent=1 // pred_region
      _
    $region5: #{tpu_custom_call.1} parent=1 // pred_fallthru
      _
    // Predicated region
    $region6: #{tpu_custom_call.1} parent=1 // pred_check
      _
    $region7: #{tpu_custom_call.1} parent=1 // pred_check_branch
      %17 = sbr.rel (0) target = $region9
    $region8: #{tpu_custom_call.1} parent=1 // pred_region
      _
    $region9: #{tpu_custom_call.1} parent=1 // pred_fallthru
      _
    // Predicated region
    $region10: #{tpu_custom_call.1} parent=1 // pred_check
      _
    $region11: #{tpu_custom_call.1} parent=1 // pred_check_branch
      %19 = sbr.rel (0) target = $region13
    $region12: #{tpu_custom_call.1} parent=1 // pred_region
      _
    $region13: #{tpu_custom_call.1} parent=1 // pred_fallthru
      _
    // Predicated region
    $region14: #{tpu_custom_call.1} parent=1 // pred_check
      _
    $region15: #{tpu_custom_call.1} parent=1 // pred_check_branch
      %21 = sbr.rel (0) target = $region17
    $region16: #{tpu_custom_call.1} parent=1 // pred_region
      _
    $region17: #{tpu_custom_call.1} parent=1 // pred_fallthru
      _
    // Predicated region
    $region18: #{tpu_custom_call.1} parent=1 // pred_check
      _
    $region19: #{tpu_custom_call.1} parent=1 // pred_check_branch
      %23 = sbr.rel (0) target = $region21
    $region20: #{tpu_custom_call.1} parent=1 // pred_region
      _
    $region21: #{tpu_custom_call.1} parent=1 // pred_fallthru
      _
    // Predicated region
    $region22: #{tpu_custom_call.1} parent=1 // pred_check
      _
    $region23: #{tpu_custom_call.1} parent=1 // pred_check_branch
      %25 = sbr.rel (0) target = $region25
    $region24: #{tpu_custom_call.1} parent=1 // pred_region
      _
    $region25: #{tpu_custom_call.1} parent=1 // pred_fallthru
      _
    // Predicated region
    $region26: #{tpu_custom_call.1} parent=1 // pred_check
      _
    $region27: #{tpu_custom_call.1} parent=1 // pred_check_branch
      %27 = sbr.rel (0) target = $region29
    $region28: #{tpu_custom_call.1} parent=1 // pred_region
      _
    $region29: #{tpu_custom_call.1} parent=1 // pred_fallthru
      _
    // Predicated region
    $region30: #{tpu_custom_call.1} parent=1 // pred_check
      _
    $region31: #{tpu_custom_call.1} parent=1 // pred_check_branch
      %29 = sbr.rel (0) target = $region33
    $region32: #{tpu_custom_call.1} parent=1 // pred_region
      _
    $region33: #{tpu_custom_call.1} parent=1 // pred_fallthru
      _
    %p31 = scmp.eq.s32.totalorder 0, 0
    // Predicated region
    $region34: #{tpu_custom_call.1} parent=1 // pred_check
      %p32 = pneg %p31
    $region35: #{tpu_custom_call.1} parent=1 // pred_check_branch
      %34 = sbr.rel (%p32) target = $region37
    $region36: #{tpu_custom_call.1} parent=1 // pred_region
      %v35 = vld [vmem:[%s7] sm:$0x1]
      %v36 = vsub.f32 %v35, 2.0
      %v37 = vmul.f32 %v36, 1.442695
      %v38 = vpow.pop %v37
      %39 = vst [vmem:[#allocation2] sm:$0x1] %v38
      %40 = vst [vmem:[#allocation3] sm:$0x1] %v38
    $region37: #{tpu_custom_call.1} parent=1 // pred_fallthru
      _
    %v41 = vld [vmem:[%s5] sm:$0xff]
    %v42 = vld [vmem:[%s5 + $0x8] sm:$0xff]
    %v43 = vld [vmem:[%s5 + $0x10] sm:$0xff]
    %v44 = vld [vmem:[%s5 + $0x18] sm:$0xff]
    %v45 = vld [vmem:[%s5 + $0x20] sm:$0xff]
    %v46 = vld [vmem:[%s5 + $0x28] sm:$0xff]
    %v47 = vld [vmem:[%s5 + $0x30] sm:$0xff]
    %v48 = vld [vmem:[%s5 + $0x38] sm:$0xff]
    %v49 = vld [vmem:[%s5 + $0x40] sm:$0xff]
    %v50 = vld [vmem:[%s5 + $0x48] sm:$0xff]
    %v51 = vld [vmem:[%s5 + $0x50] sm:$0xff]
    %v52 = vld [vmem:[%s5 + $0x58] sm:$0xff]
    %v53 = vld [vmem:[%s5 + $0x60] sm:$0xff]
    %v54 = vld [vmem:[%s5 + $0x68] sm:$0xff]
    %v55 = vld [vmem:[%s5 + $0x70] sm:$0xff]
    %v56 = vld [vmem:[%s5 + $0x78] sm:$0xff]
    %v57 = vld [vmem:[%s4] sm:$0x1]
    %58 = vset.pattern.permute.xlu0 0
    %59 = vperm.xlu0 %58, %v41
    %v60 = vpop.permute.xlu0 %59
    %61 = vset.pattern.permute.xlu0 0
    %62 = vperm.xlu0 %61, %v42
    %v63 = vpop.permute.xlu0 %62
    %64 = vset.pattern.permute.xlu0 0
    %65 = vperm.xlu0 %64, %v43
    %v66 = vpop.permute.xlu0 %65
    %67 = vset.pattern.permute.xlu0 0
    %68 = vperm.xlu0 %67, %v44
    %v69 = vpop.permute.xlu0 %68
    %70 = vset.pattern.permute.xlu0 0
    %71 = vperm.xlu0 %70, %v45
    %v72 = vpop.permute.xlu0 %71
    %73 = vset.pattern.permute.xlu0 0
    %74 = vperm.xlu0 %73, %v46
    %v75 = vpop.permute.xlu0 %74
    %76 = vset.pattern.permute.xlu0 0
    %77 = vperm.xlu0 %76, %v47
    %v78 = vpop.permute.xlu0 %77
    %79 = vset.pattern.permute.xlu0 0
    %80 = vperm.xlu0 %79, %v48
    %v81 = vpop.permute.xlu0 %80
    %82 = vset.pattern.permute.xlu0 0
    %83 = vperm.xlu0 %82, %v49
    %v84 = vpop.permute.xlu0 %83
    %85 = vset.pattern.permute.xlu0 0
    %86 = vperm.xlu0 %85, %v50
    %v87 = vpop.permute.xlu0 %86
    %88 = vset.pattern.permute.xlu0 0
    %89 = vperm.xlu0 %88, %v51
    %v90 = vpop.permute.xlu0 %89
    %91 = vset.pattern.permute.xlu0 0
    %92 = vperm.xlu0 %91, %v52
    %v93 = vpop.permute.xlu0 %92
    %94 = vset.pattern.permute.xlu0 0
    %95 = vperm.xlu0 %94, %v53
    %v96 = vpop.permute.xlu0 %95
    %97 = vset.pattern.permute.xlu0 0
    %98 = vperm.xlu0 %97, %v54
    %v99 = vpop.permute.xlu0 %98
    %100 = vset.pattern.permute.xlu0 0
    %101 = vperm.xlu0 %100, %v55
    %v102 = vpop.permute.xlu0 %101
    %103 = vset.pattern.permute.xlu0 0
    %104 = vperm.xlu0 %103, %v56
    %v105 = vpop.permute.xlu0 %104
    %v106 = vlaneseq
    %v107 = vshrl.u32 %v106, 7
    %v108 = vsub.s32 0, %v107
    %v109 = vrot.slane %v57, %v108
    %vm110 = vcmp.ne.s32.totalorder %v60, %v109
    %vm111 = vcmp.ne.s32.totalorder %v63, %v109
    %vm112 = vcmp.ne.s32.totalorder %v66, %v109
    %vm113 = vcmp.ne.s32.totalorder %v69, %v109
    %vm114 = vcmp.ne.s32.totalorder %v72, %v109
    %vm115 = vcmp.ne.s32.totalorder %v75, %v109
    %vm116 = vcmp.ne.s32.totalorder %v78, %v109
    %vm117 = vcmp.ne.s32.totalorder %v81, %v109
    %vm118 = vcmp.ne.s32.totalorder %v84, %v109
    %vm119 = vcmp.ne.s32.totalorder %v87, %v109
    %vm120 = vcmp.ne.s32.totalorder %v90, %v109
    %vm121 = vcmp.ne.s32.totalorder %v93, %v109
    %vm122 = vcmp.ne.s32.totalorder %v96, %v109
    %vm123 = vcmp.ne.s32.totalorder %v99, %v109
    %vm124 = vcmp.ne.s32.totalorder %v102, %v109
    %vm125 = vcmp.ne.s32.totalorder %v105, %v109
    %v126 = vld [vmem:[%s6] sm:$0xff]
    %v127 = vld [vmem:[%s6 + $0x8] sm:$0xff]
    %v128 = vld [vmem:[%s6 + $0x10] sm:$0xff]
    %v129 = vld [vmem:[%s6 + $0x18] sm:$0xff]
    %v130 = vld [vmem:[%s6 + $0x20] sm:$0xff]
    %v131 = vld [vmem:[%s6 + $0x28] sm:$0xff]
    %v132 = vld [vmem:[%s6 + $0x30] sm:$0xff]
    %v133 = vld [vmem:[%s6 + $0x38] sm:$0xff]
    %v134 = vld [vmem:[%s6 + $0x40] sm:$0xff]
    %v135 = vld [vmem:[%s6 + $0x48] sm:$0xff]
    %v136 = vld [vmem:[%s6 + $0x50] sm:$0xff]
    %v137 = vld [vmem:[%s6 + $0x58] sm:$0xff]
    %v138 = vld [vmem:[%s6 + $0x60] sm:$0xff]
    %v139 = vld [vmem:[%s6 + $0x68] sm:$0xff]
    %v140 = vld [vmem:[%s6 + $0x70] sm:$0xff]
    %v141 = vld [vmem:[%s6 + $0x78] sm:$0xff]
    %vm142 = vcmp.ne.s32.totalorder %v126, 0
    %vm143 = vcmp.ne.s32.totalorder %v127, 0
    %vm144 = vcmp.ne.s32.totalorder %v128, 0
    %vm145 = vcmp.ne.s32.totalorder %v129, 0
    %vm146 = vcmp.ne.s32.totalorder %v130, 0
    %vm147 = vcmp.ne.s32.totalorder %v131, 0
    %vm148 = vcmp.ne.s32.totalorder %v132, 0
    %vm149 = vcmp.ne.s32.totalorder %v133, 0
    %vm150 = vcmp.ne.s32.totalorder %v134, 0
    %vm151 = vcmp.ne.s32.totalorder %v135, 0
    %vm152 = vcmp.ne.s32.totalorder %v136, 0
    %vm153 = vcmp.ne.s32.totalorder %v137, 0
    %vm154 = vcmp.ne.s32.totalorder %v138, 0
    %vm155 = vcmp.ne.s32.totalorder %v139, 0
    %vm156 = vcmp.ne.s32.totalorder %v140, 0
    %vm157 = vcmp.ne.s32.totalorder %v141, 0
    %v158 = vsel %vm142, 1, 0
    %v159 = vsel %vm143, 1, 0
    %v160 = vsel %vm144, 1, 0
    %v161 = vsel %vm145, 1, 0
    %v162 = vsel %vm146, 1, 0
    %v163 = vsel %vm147, 1, 0
    %v164 = vsel %vm148, 1, 0
    %v165 = vsel %vm149, 1, 0
    %v166 = vsel %vm150, 1, 0
    %v167 = vsel %vm151, 1, 0
    %v168 = vsel %vm152, 1, 0
    %v169 = vsel %vm153, 1, 0
    %v170 = vsel %vm154, 1, 0
    %v171 = vsel %vm155, 1, 0
    %v172 = vsel %vm156, 1, 0
    %v173 = vsel %vm157, 1, 0
    %174 = vset.pattern.permute.xlu0 0
    %175 = vperm.xlu0 %174, %v158
    %v176 = vpop.permute.xlu0 %175
    %177 = vset.pattern.permute.xlu0 0
    %178 = vperm.xlu0 %177, %v159
    %v179 = vpop.permute.xlu0 %178
    %180 = vset.pattern.permute.xlu0 0
    %181 = vperm.xlu0 %180, %v160
    %v182 = vpop.permute.xlu0 %181
    %183 = vset.pattern.permute.xlu0 0
    %184 = vperm.xlu0 %183, %v161
    %v185 = vpop.permute.xlu0 %184
    %186 = vset.pattern.permute.xlu0 0
    %187 = vperm.xlu0 %186, %v162
    %v188 = vpop.permute.xlu0 %187
    %189 = vset.pattern.permute.xlu0 0
    %190 = vperm.xlu0 %189, %v163
    %v191 = vpop.permute.xlu0 %190
    %192 = vset.pattern.permute.xlu0 0
    %193 = vperm.xlu0 %192, %v164
    %v194 = vpop.permute.xlu0 %193
    %195 = vset.pattern.permute.xlu0 0
    %196 = vperm.xlu0 %195, %v165
    %v197 = vpop.permute.xlu0 %196
    %198 = vset.pattern.permute.xlu0 0
    %199 = vperm.xlu0 %198, %v166
    %v200 = vpop.permute.xlu0 %199
    %201 = vset.pattern.permute.xlu0 0
    %202 = vperm.xlu0 %201, %v167
    %v203 = vpop.permute.xlu0 %202
    %204 = vset.pattern.permute.xlu0 0
    %205 = vperm.xlu0 %204, %v168
    %v206 = vpop.permute.xlu0 %205
    %207 = vset.pattern.permute.xlu0 0
    %208 = vperm.xlu0 %207, %v169
    %v209 = vpop.permute.xlu0 %208
    %210 = vset.pattern.permute.xlu0 0
    %211 = vperm.xlu0 %210, %v170
    %v212 = vpop.permute.xlu0 %211
    %213 = vset.pattern.permute.xlu0 0
    %214 = vperm.xlu0 %213, %v171
    %v215 = vpop.permute.xlu0 %214
    %216 = vset.pattern.permute.xlu0 0
    %217 = vperm.xlu0 %216, %v172
    %v218 = vpop.permute.xlu0 %217
    %219 = vset.pattern.permute.xlu0 0
    %220 = vperm.xlu0 %219, %v173
    %v221 = vpop.permute.xlu0 %220
    %vm222 = vcmp.eq.s32.totalorder %v176, 1
    %vm223 = vcmp.eq.s32.totalorder %v179, 1
    %vm224 = vcmp.eq.s32.totalorder %v182, 1
    %vm225 = vcmp.eq.s32.totalorder %v185, 1
    %vm226 = vcmp.eq.s32.totalorder %v188, 1
    %vm227 = vcmp.eq.s32.totalorder %v191, 1
    %vm228 = vcmp.eq.s32.totalorder %v194, 1
    %vm229 = vcmp.eq.s32.totalorder %v197, 1
    %vm230 = vcmp.eq.s32.totalorder %v200, 1
    %vm231 = vcmp.eq.s32.totalorder %v203, 1
    %vm232 = vcmp.eq.s32.totalorder %v206, 1
    %vm233 = vcmp.eq.s32.totalorder %v209, 1
    %vm234 = vcmp.eq.s32.totalorder %v212, 1
    %vm235 = vcmp.eq.s32.totalorder %v215, 1
    %vm236 = vcmp.eq.s32.totalorder %v218, 1
    %vm237 = vcmp.eq.s32.totalorder %v221, 1
    %vm238 = vmand %vm110, %vm222
    %vm239 = vmand %vm111, %vm223
    %vm240 = vmand %vm112, %vm224
    %vm241 = vmand %vm113, %vm225
    %vm242 = vmand %vm114, %vm226
    %vm243 = vmand %vm115, %vm227
    %vm244 = vmand %vm116, %vm228
    %vm245 = vmand %vm117, %vm229
    %vm246 = vmand %vm118, %vm230
    %vm247 = vmand %vm119, %vm231
    %vm248 = vmand %vm120, %vm232
    %vm249 = vmand %vm121, %vm233
    %vm250 = vmand %vm122, %vm234
    %vm251 = vmand %vm123, %vm235
    %vm252 = vmand %vm124, %vm236
    %vm253 = vmand %vm125, %vm237
    %v254 = vld [vmem:[%s0] sm:$0xf]
    %v255 = vld [vmem:[%s0 + $0x4] sm:$0xf]
    %v256 = vld [vmem:[%s0 + $0x8] sm:$0xf]
    %v257 = vld [vmem:[%s0 + $0xc] sm:$0xf]
    %v258 = vld [vmem:[%s0 + $0x10] sm:$0xf]
    %v259 = vld [vmem:[%s0 + $0x14] sm:$0xf]
    %v260 = vld [vmem:[%s0 + $0x18] sm:$0xf]
    %v261 = vld [vmem:[%s0 + $0x1c] sm:$0xf]
    %v262 = vld [vmem:[%s0 + $0x20] sm:$0xf]
    %v263 = vld [vmem:[%s0 + $0x24] sm:$0xf]
    %v264 = vld [vmem:[%s0 + $0x28] sm:$0xf]
    %v265 = vld [vmem:[%s0 + $0x2c] sm:$0xf]
    %v266 = vld [vmem:[%s0 + $0x30] sm:$0xf]
    %v267 = vld [vmem:[%s0 + $0x34] sm:$0xf]
    %v268 = vld [vmem:[%s0 + $0x38] sm:$0xf]
    %v269 = vld [vmem:[%s0 + $0x3c] sm:$0xf]
    %v270 = vld [vmem:[%s1] sm:$0xf]
    %v271 = vld [vmem:[%s1 + $0x4] sm:$0xf]
    %v272 = vld [vmem:[%s1 + $0x8] sm:$0xf]
    %v273 = vld [vmem:[%s1 + $0xc] sm:$0xf]
    %v274 = vld [vmem:[%s1 + $0x10] sm:$0xf]
    %v275 = vld [vmem:[%s1 + $0x14] sm:$0xf]
    %v276 = vld [vmem:[%s1 + $0x18] sm:$0xf]
    %v277 = vld [vmem:[%s1 + $0x1c] sm:$0xf]
    %v278 = vld [vmem:[%s1 + $0x20] sm:$0xf]
    %v279 = vld [vmem:[%s1 + $0x24] sm:$0xf]
    %v280 = vld [vmem:[%s1 + $0x28] sm:$0xf]
    %v281 = vld [vmem:[%s1 + $0x2c] sm:$0xf]
    %v282 = vld [vmem:[%s1 + $0x30] sm:$0xf]
    %v283 = vld [vmem:[%s1 + $0x34] sm:$0xf]
    %v284 = vld [vmem:[%s1 + $0x38] sm:$0xf]
    %v285 = vld [vmem:[%s1 + $0x3c] sm:$0xf]
    %v286 = vld [vmem:[%s2] sm:$0xf]
    %v287 = vld [vmem:[%s2 + $0x4] sm:$0xf]
    %v288 = vld [vmem:[%s2 + $0x8] sm:$0xf]
    %v289 = vld [vmem:[%s2 + $0xc] sm:$0xf]
    %v290 = vld [vmem:[%s2 + $0x10] sm:$0xf]
    %v291 = vld [vmem:[%s2 + $0x14] sm:$0xf]
    %v292 = vld [vmem:[%s2 + $0x18] sm:$0xf]
    %v293 = vld [vmem:[%s2 + $0x1c] sm:$0xf]
    %v294 = vld [vmem:[%s2 + $0x20] sm:$0xf]
    %v295 = vld [vmem:[%s2 + $0x24] sm:$0xf]
    %v296 = vld [vmem:[%s2 + $0x28] sm:$0xf]
    %v297 = vld [vmem:[%s2 + $0x2c] sm:$0xf]
    %v298 = vld [vmem:[%s2 + $0x30] sm:$0xf]
    %v299 = vld [vmem:[%s2 + $0x34] sm:$0xf]
    %v300 = vld [vmem:[%s2 + $0x38] sm:$0xf]
    %v301 = vld [vmem:[%s2 + $0x3c] sm:$0xf]
    %v302 = vld [vmem:[%s3] sm:$0xf]
    %v303 = vld [vmem:[%s3 + $0x4] sm:$0xf]
    %v304 = vld [vmem:[%s3 + $0x8] sm:$0xf]
    %v305 = vld [vmem:[%s3 + $0xc] sm:$0xf]
    %v306 = vld [vmem:[%s3 + $0x10] sm:$0xf]
    %v307 = vld [vmem:[%s3 + $0x14] sm:$0xf]
    %v308 = vld [vmem:[%s3 + $0x18] sm:$0xf]
    %v309 = vld [vmem:[%s3 + $0x1c] sm:$0xf]
    %v310 = vld [vmem:[%s3 + $0x20] sm:$0xf]
    %v311 = vld [vmem:[%s3 + $0x24] sm:$0xf]
    %v312 = vld [vmem:[%s3 + $0x28] sm:$0xf]
    %v313 = vld [vmem:[%s3 + $0x2c] sm:$0xf]
    %v314 = vld [vmem:[%s3 + $0x30] sm:$0xf]
    %v315 = vld [vmem:[%s3 + $0x34] sm:$0xf]
    %v316 = vld [vmem:[%s3 + $0x38] sm:$0xf]
    %v317 = vld [vmem:[%s3 + $0x3c] sm:$0xf]
    %v334 = vunpack.c.l.b16 %v302
    %v335 = vunpack.c.l.b16 %v303
    %v336 = vunpack.c.l.b16 %v304
    %v337 = vunpack.c.l.b16 %v305
    %v338 = vunpack.c.l.b16 %v306
    %v339 = vunpack.c.l.b16 %v307
    %v340 = vunpack.c.l.b16 %v308
    %v341 = vunpack.c.l.b16 %v309
    %v342 = vunpack.c.l.b16 %v310
    %v343 = vunpack.c.l.b16 %v311
    %v344 = vunpack.c.l.b16 %v312
    %v345 = vunpack.c.l.b16 %v313
    %v346 = vunpack.c.l.b16 %v314
    %v347 = vunpack.c.l.b16 %v315
    %v348 = vunpack.c.l.b16 %v316
    %v349 = vunpack.c.l.b16 %v317
    %v350 = vpack.c.b16 %v335, %v334
    %v351 = vpack.c.b16 %v337, %v336
    %v352 = vpack.c.b16 %v339, %v338
    %v353 = vpack.c.b16 %v341, %v340
    %v354 = vpack.c.b16 %v343, %v342
    %v355 = vpack.c.b16 %v345, %v344
    %v356 = vpack.c.b16 %v347, %v346
    %v357 = vpack.c.b16 %v349, %v348
    %v374 = vunpack.c.l.b16 %v254
    %v375 = vunpack.c.l.b16 %v255
    %v376 = vunpack.c.l.b16 %v256
    %v377 = vunpack.c.l.b16 %v257
    %v378 = vunpack.c.l.b16 %v258
    %v379 = vunpack.c.l.b16 %v259
    %v380 = vunpack.c.l.b16 %v260
    %v381 = vunpack.c.l.b16 %v261
    %v382 = vunpack.c.l.b16 %v262
    %v383 = vunpack.c.l.b16 %v263
    %v384 = vunpack.c.l.b16 %v264
    %v385 = vunpack.c.l.b16 %v265
    %v386 = vunpack.c.l.b16 %v266
    %v387 = vunpack.c.l.b16 %v267
    %v388 = vunpack.c.l.b16 %v268
    %v389 = vunpack.c.l.b16 %v269
    %v390 = vpack.c.b16 %v375, %v374
    %v391 = vpack.c.b16 %v377, %v376
    %v392 = vpack.c.b16 %v379, %v378
    %v393 = vpack.c.b16 %v381, %v380
    %v394 = vpack.c.b16 %v383, %v382
    %v395 = vpack.c.b16 %v385, %v384
    %v396 = vpack.c.b16 %v387, %v386
    %v397 = vpack.c.b16 %v389, %v388
    %vm398 = vcmask 261120
    %v400 = vsel %vm398, %v350, 0
    %v403 = vsel %vm398, %v351, 0
    %v406 = vsel %vm398, %v352, 0
    %v409 = vsel %vm398, %v353, 0
    %v412 = vsel %vm398, %v354, 0
    %v415 = vsel %vm398, %v355, 0
    %v418 = vsel %vm398, %v356, 0
    %v421 = vsel %vm398, %v357, 0
    %v424 = vsel %vm398, %v390, 0
    %v427 = vsel %vm398, %v391, 0
    %v430 = vsel %vm398, %v392, 0
    %v433 = vsel %vm398, %v393, 0
    %v436 = vsel %vm398, %v394, 0
    %v439 = vsel %vm398, %v395, 0
    %v442 = vsel %vm398, %v396, 0
    %v445 = vsel %vm398, %v397, 0
    %447 = vmatprep.subr.bf16.mxu0 0
    %448 = vmatpush1.bf16.xpose.msra.mxu0 %v424
    %449 = vmatprep.subr.bf16.mxu0 0
    %450 = vmatpush1.bf16.xpose.msra.mxu0 %v427
    %451 = vmatprep.subr.bf16.mxu0 0
    %452 = vmatpush1.bf16.xpose.msra.mxu0 %v430
    %453 = vmatprep.subr.bf16.mxu0 0
    %454 = vmatpush1.bf16.xpose.msra.mxu0 %v433
    %455 = vmatprep.subr.bf16.mxu0 0
    %456 = vmatpush1.bf16.xpose.msra.mxu0 %v436
    %457 = vmatprep.subr.bf16.mxu0 0
    %458 = vmatpush1.bf16.xpose.msra.mxu0 %v439
    %459 = vmatprep.subr.bf16.mxu0 0
    %460 = vmatpush1.bf16.xpose.msra.mxu0 %v442
    %461 = vmatprep.subr.bf16.mxu0 0
    %462 = vmatpush1.bf16.xpose.msra.mxu0 %v445
    %463 = vmatprep.subr.bf16.mxu0 0
    %464 = vmatpush1.bf16.xpose.msra.mxu0 0
    %465 = vmatprep.subr.bf16.mxu0 0
    %466 = vmatpush1.bf16.xpose.msra.mxu0 0
    %467 = vmatprep.subr.bf16.mxu0 0
    %468 = vmatpush1.bf16.xpose.msra.mxu0 0
    %469 = vmatprep.subr.bf16.mxu0 0
    %470 = vmatpush1.bf16.xpose.msra.mxu0 0
    %471 = vmatprep.subr.bf16.mxu0 0
    %472 = vmatpush1.bf16.xpose.msra.mxu0 0
    %473 = vmatprep.subr.bf16.mxu0 0
    %474 = vmatpush1.bf16.xpose.msra.mxu0 0
    %475 = vmatprep.subr.bf16.mxu0 0
    %476 = vmatpush1.bf16.xpose.msra.mxu0 0
    %477 = vmatprep.subr.bf16.mxu0 0
    %478 = vmatpush1.bf16.xpose.msra.mxu0 0
    %479 = vmatprep.mubr.bf16.mxu0 0
    %480 = vmatmul.mubr.bf16.gmra.mrb[0].mxu0 %v400
    %v481 = vpop.f32.mrb[0].mxu0
    %v482 = vadd.f32 0.0, %v481
    %v483 = vpop.f32.mrb[0].mxu0
    %v484 = vpop.f32.mrb[0].mxu0
    %v485 = vadd.f32 0.0, %v484
    %v486 = vpop.f32.mrb[0].mxu0
    %487 = vmatprep.mubr.bf16.mxu0 0
    %488 = vmatmul.mubr.bf16.gmra.mrb[0].mxu0 %v403
    %v489 = vpop.f32.mrb[0].mxu0
    %v490 = vadd.f32 0.0, %v489
    %v491 = vpop.f32.mrb[0].mxu0
    %v492 = vpop.f32.mrb[0].mxu0
    %v493 = vadd.f32 0.0, %v492
    %v494 = vpop.f32.mrb[0].mxu0
    %495 = vmatprep.mubr.bf16.mxu0 0
    %496 = vmatmul.mubr.bf16.gmra.mrb[0].mxu0 %v406
    %v497 = vpop.f32.mrb[0].mxu0
    %v498 = vadd.f32 0.0, %v497
    %v499 = vpop.f32.mrb[0].mxu0
    %v500 = vpop.f32.mrb[0].mxu0
    %v501 = vadd.f32 0.0, %v500
    %v502 = vpop.f32.mrb[0].mxu0
    %503 = vmatprep.mubr.bf16.mxu0 0
    %504 = vmatmul.mubr.bf16.gmra.mrb[0].mxu0 %v409
    %v505 = vpop.f32.mrb[0].mxu0
    %v506 = vadd.f32 0.0, %v505
    %v507 = vpop.f32.mrb[0].mxu0
    %v508 = vpop.f32.mrb[0].mxu0
    %v509 = vadd.f32 0.0, %v508
    %v510 = vpop.f32.mrb[0].mxu0
    %511 = vmatprep.mubr.bf16.mxu0 0
    %512 = vmatmul.mubr.bf16.gmra.mrb[0].mxu0 %v412
    %v513 = vpop.f32.mrb[0].mxu0
    %v514 = vadd.f32 0.0, %v513
    %v515 = vpop.f32.mrb[0].mxu0
    %v516 = vpop.f32.mrb[0].mxu0
    %v517 = vadd.f32 0.0, %v516
    %v518 = vpop.f32.mrb[0].mxu0
    %519 = vmatprep.mubr.bf16.mxu0 0
    %520 = vmatmul.mubr.bf16.gmra.mrb[0].mxu0 %v415
    %v521 = vpop.f32.mrb[0].mxu0
    %v522 = vadd.f32 0.0, %v521
    %v523 = vpop.f32.mrb[0].mxu0
    %v524 = vpop.f32.mrb[0].mxu0
    %v525 = vadd.f32 0.0, %v524
    %v526 = vpop.f32.mrb[0].mxu0
    %527 = vmatprep.mubr.bf16.mxu0 0
    %528 = vmatmul.mubr.bf16.gmra.mrb[0].mxu0 %v418
    %v529 = vpop.f32.mrb[0].mxu0
    %v530 = vadd.f32 0.0, %v529
    %v531 = vpop.f32.mrb[0].mxu0
    %v532 = vpop.f32.mrb[0].mxu0
    %v533 = vadd.f32 0.0, %v532
    %v534 = vpop.f32.mrb[0].mxu0
    %535 = vmatprep.mubr.bf16.mxu0 0
    %536 = vmatmul.mubr.bf16.gmra.mrb[0].mxu0 %v421
    %v537 = vpop.f32.mrb[0].mxu0
    %v538 = vadd.f32 0.0, %v537
    %v539 = vpop.f32.mrb[0].mxu0
    %v540 = vpop.f32.mrb[0].mxu0
    %v541 = vadd.f32 0.0, %v540
    %v542 = vpop.f32.mrb[0].mxu0
    %543 = vdwg.mxu0
    %v560 = vunpack.c.l.b16 %v286
    %v561 = vunpack.c.l.b16 %v287
    %v562 = vunpack.c.l.b16 %v288
    %v563 = vunpack.c.l.b16 %v289
    %v564 = vunpack.c.l.b16 %v290
    %v565 = vunpack.c.l.b16 %v291
    %v566 = vunpack.c.l.b16 %v292
    %v567 = vunpack.c.l.b16 %v293
    %v568 = vunpack.c.l.b16 %v294
    %v569 = vunpack.c.l.b16 %v295
    %v570 = vunpack.c.l.b16 %v296
    %v571 = vunpack.c.l.b16 %v297
    %v572 = vunpack.c.l.b16 %v298
    %v573 = vunpack.c.l.b16 %v299
    %v574 = vunpack.c.l.b16 %v300
    %v575 = vunpack.c.l.b16 %v301
    %v576 = vpack.c.b16 %v561, %v560
    %v577 = vpack.c.b16 %v563, %v562
    %v578 = vpack.c.b16 %v565, %v564
    %v579 = vpack.c.b16 %v567, %v566
    %v580 = vpack.c.b16 %v569, %v568
    %v581 = vpack.c.b16 %v571, %v570
    %v582 = vpack.c.b16 %v573, %v572
    %v583 = vpack.c.b16 %v575, %v574
    %v585 = vsel %vm398, %v576, 0
    %v588 = vsel %vm398, %v577, 0
    %v591 = vsel %vm398, %v578, 0
    %v594 = vsel %vm398, %v579, 0
    %v597 = vsel %vm398, %v580, 0
    %v600 = vsel %vm398, %v581, 0
    %v603 = vsel %vm398, %v582, 0
    %v606 = vsel %vm398, %v583, 0
    %608 = vmatprep.subr.bf16.mxu0 0
    %609 = vmatpush1.bf16.xpose.msra.mxu0 %v424
    %610 = vmatprep.subr.bf16.mxu0 0
    %611 = vmatpush1.bf16.xpose.msra.mxu0 %v427
    %612 = vmatprep.subr.bf16.mxu0 0
    %613 = vmatpush1.bf16.xpose.msra.mxu0 %v430
    %614 = vmatprep.subr.bf16.mxu0 0
    %615 = vmatpush1.bf16.xpose.msra.mxu0 %v433
    %616 = vmatprep.subr.bf16.mxu0 0
    %617 = vmatpush1.bf16.xpose.msra.mxu0 %v436
    %618 = vmatprep.subr.bf16.mxu0 0
    %619 = vmatpush1.bf16.xpose.msra.mxu0 %v439
    %620 = vmatprep.subr.bf16.mxu0 0
    %621 = vmatpush1.bf16.xpose.msra.mxu0 %v442
    %622 = vmatprep.subr.bf16.mxu0 0
    %623 = vmatpush1.bf16.xpose.msra.mxu0 %v445
    %624 = vmatprep.subr.bf16.mxu0 0
    %625 = vmatpush1.bf16.xpose.msra.mxu0 0
    %626 = vmatprep.subr.bf16.mxu0 0
    %627 = vmatpush1.bf16.xpose.msra.mxu0 0
    %628 = vmatprep.subr.bf16.mxu0 0
    %629 = vmatpush1.bf16.xpose.msra.mxu0 0
    %630 = vmatprep.subr.bf16.mxu0 0
    %631 = vmatpush1.bf16.xpose.msra.mxu0 0
    %632 = vmatprep.subr.bf16.mxu0 0
    %633 = vmatpush1.bf16.xpose.msra.mxu0 0
    %634 = vmatprep.subr.bf16.mxu0 0
    %635 = vmatpush1.bf16.xpose.msra.mxu0 0
    %636 = vmatprep.subr.bf16.mxu0 0
    %637 = vmatpush1.bf16.xpose.msra.mxu0 0
    %638 = vmatprep.subr.bf16.mxu0 0
    %639 = vmatpush1.bf16.xpose.msra.mxu0 0
    %640 = vmatprep.mubr.bf16.mxu0 0
    %641 = vmatmul.mubr.bf16.gmra.mrb[0].mxu0 %v585
    %v642 = vpop.f32.mrb[0].mxu0
    %v643 = vadd.f32 0.0, %v642
    %v644 = vpop.f32.mrb[0].mxu0
    %v645 = vpop.f32.mrb[0].mxu0
    %v646 = vadd.f32 0.0, %v645
    %v647 = vpop.f32.mrb[0].mxu0
    %648 = vmatprep.mubr.bf16.mxu0 0
    %649 = vmatmul.mubr.bf16.gmra.mrb[0].mxu0 %v588
    %v650 = vpop.f32.mrb[0].mxu0
    %v651 = vadd.f32 0.0, %v650
    %v652 = vpop.f32.mrb[0].mxu0
    %v653 = vpop.f32.mrb[0].mxu0
    %v654 = vadd.f32 0.0, %v653
    %v655 = vpop.f32.mrb[0].mxu0
    %656 = vmatprep.mubr.bf16.mxu0 0
    %657 = vmatmul.mubr.bf16.gmra.mrb[0].mxu0 %v591
    %v658 = vpop.f32.mrb[0].mxu0
    %v659 = vadd.f32 0.0, %v658
    %v660 = vpop.f32.mrb[0].mxu0
    %v661 = vpop.f32.mrb[0].mxu0
    %v662 = vadd.f32 0.0, %v661
    %v663 = vpop.f32.mrb[0].mxu0
    %664 = vmatprep.mubr.bf16.mxu0 0
    %665 = vmatmul.mubr.bf16.gmra.mrb[0].mxu0 %v594
    %v666 = vpop.f32.mrb[0].mxu0
    %v667 = vadd.f32 0.0, %v666
    %v668 = vpop.f32.mrb[0].mxu0
    %v669 = vpop.f32.mrb[0].mxu0
    %v670 = vadd.f32 0.0, %v669
    %v671 = vpop.f32.mrb[0].mxu0
    %672 = vmatprep.mubr.bf16.mxu0 0
    %673 = vmatmul.mubr.bf16.gmra.mrb[0].mxu0 %v597
    %v674 = vpop.f32.mrb[0].mxu0
    %v675 = vadd.f32 0.0, %v674
    %v676 = vpop.f32.mrb[0].mxu0
    %v677 = vpop.f32.mrb[0].mxu0
    %v678 = vadd.f32 0.0, %v677
    %v679 = vpop.f32.mrb[0].mxu0
    %680 = vmatprep.mubr.bf16.mxu0 0
    %681 = vmatmul.mubr.bf16.gmra.mrb[0].mxu0 %v600
    %v682 = vpop.f32.mrb[0].mxu0
    %v683 = vadd.f32 0.0, %v682
    %v684 = vpop.f32.mrb[0].mxu0
    %v685 = vpop.f32.mrb[0].mxu0
    %v686 = vadd.f32 0.0, %v685
    %v687 = vpop.f32.mrb[0].mxu0
    %688 = vmatprep.mubr.bf16.mxu0 0
    %689 = vmatmul.mubr.bf16.gmra.mrb[0].mxu0 %v603
    %v690 = vpop.f32.mrb[0].mxu0
    %v691 = vadd.f32 0.0, %v690
    %v692 = vpop.f32.mrb[0].mxu0
    %v693 = vpop.f32.mrb[0].mxu0
    %v694 = vadd.f32 0.0, %v693
    %v695 = vpop.f32.mrb[0].mxu0
    %696 = vmatprep.mubr.bf16.mxu0 0
    %697 = vmatmul.mubr.bf16.gmra.mrb[0].mxu0 %v606
    %v698 = vpop.f32.mrb[0].mxu0
    %v699 = vadd.f32 0.0, %v698
    %v700 = vpop.f32.mrb[0].mxu0
    %v701 = vpop.f32.mrb[0].mxu0
    %v702 = vadd.f32 0.0, %v701
    %v703 = vpop.f32.mrb[0].mxu0
    %704 = vdwg.mxu0
    %v705 = vsub.f32 %v482, 2.0
    %v706 = vsub.f32 %v485, 2.0
    %v707 = vsub.f32 %v490, 2.0
    %v708 = vsub.f32 %v493, 2.0
    %v709 = vsub.f32 %v498, 2.0
    %v710 = vsub.f32 %v501, 2.0
    %v711 = vsub.f32 %v506, 2.0
    %v712 = vsub.f32 %v509, 2.0
    %v713 = vsub.f32 %v514, 2.0
    %v714 = vsub.f32 %v517, 2.0
    %v715 = vsub.f32 %v522, 2.0
    %v716 = vsub.f32 %v525, 2.0
    %v717 = vsub.f32 %v530, 2.0
    %v718 = vsub.f32 %v533, 2.0
    %v719 = vsub.f32 %v538, 2.0
    %v720 = vsub.f32 %v541, 2.0
    %v721 = vmul.f32 %v705, 1.442695
    %v722 = vpow.pop %v721
    %v723 = vmul.f32 %v706, 1.442695
    %v724 = vpow.pop %v723
    %v725 = vmul.f32 %v707, 1.442695
    %v726 = vpow.pop %v725
    %v727 = vmul.f32 %v708, 1.442695
    %v728 = vpow.pop %v727
    %v729 = vmul.f32 %v709, 1.442695
    %v730 = vpow.pop %v729
    %v731 = vmul.f32 %v710, 1.442695
    %v732 = vpow.pop %v731
    %v733 = vmul.f32 %v711, 1.442695
    %v734 = vpow.pop %v733
    %v735 = vmul.f32 %v712, 1.442695
    %v736 = vpow.pop %v735
    %v737 = vmul.f32 %v713, 1.442695
    %v738 = vpow.pop %v737
    %v739 = vmul.f32 %v714, 1.442695
    %v740 = vpow.pop %v739
    %v741 = vmul.f32 %v715, 1.442695
    %v742 = vpow.pop %v741
    %v743 = vmul.f32 %v716, 1.442695
    %v744 = vpow.pop %v743
    %v745 = vmul.f32 %v717, 1.442695
    %v746 = vpow.pop %v745
    %v747 = vmul.f32 %v718, 1.442695
    %v748 = vpow.pop %v747
    %v749 = vmul.f32 %v719, 1.442695
    %v750 = vpow.pop %v749
    %v751 = vmul.f32 %v720, 1.442695
    %v752 = vpow.pop %v751
    %v753 = vsub.f32 %v643, 2.0
    %v754 = vsub.f32 %v646, 2.0
    %v755 = vsub.f32 %v651, 2.0
    %v756 = vsub.f32 %v654, 2.0
    %v757 = vsub.f32 %v659, 2.0
    %v758 = vsub.f32 %v662, 2.0
    %v759 = vsub.f32 %v667, 2.0
    %v760 = vsub.f32 %v670, 2.0
    %v761 = vsub.f32 %v675, 2.0
    %v762 = vsub.f32 %v678, 2.0
    %v763 = vsub.f32 %v683, 2.0
    %v764 = vsub.f32 %v686, 2.0
    %v765 = vsub.f32 %v691, 2.0
    %v766 = vsub.f32 %v694, 2.0
    %v767 = vsub.f32 %v699, 2.0
    %v768 = vsub.f32 %v702, 2.0
    %v769 = vmul.f32 %v753, 1.442695
    %v770 = vpow.pop %v769
    %v771 = vmul.f32 %v754, 1.442695
    %v772 = vpow.pop %v771
    %v773 = vmul.f32 %v755, 1.442695
    %v774 = vpow.pop %v773
    %v775 = vmul.f32 %v756, 1.442695
    %v776 = vpow.pop %v775
    %v777 = vmul.f32 %v757, 1.442695
    %v778 = vpow.pop %v777
    %v779 = vmul.f32 %v758, 1.442695
    %v780 = vpow.pop %v779
    %v781 = vmul.f32 %v759, 1.442695
    %v782 = vpow.pop %v781
    %v783 = vmul.f32 %v760, 1.442695
    %v784 = vpow.pop %v783
    %v785 = vmul.f32 %v761, 1.442695
    %v786 = vpow.pop %v785
    %v787 = vmul.f32 %v762, 1.442695
    %v788 = vpow.pop %v787
    %v789 = vmul.f32 %v763, 1.442695
    %v790 = vpow.pop %v789
    %v791 = vmul.f32 %v764, 1.442695
    %v792 = vpow.pop %v791
    %v793 = vmul.f32 %v765, 1.442695
    %v794 = vpow.pop %v793
    %v795 = vmul.f32 %v766, 1.442695
    %v796 = vpow.pop %v795
    %v797 = vmul.f32 %v767, 1.442695
    %v798 = vpow.pop %v797
    %v799 = vmul.f32 %v768, 1.442695
    %v800 = vpow.pop %v799
    %v801 = vadd.f32 %v722, %v770
    %v802 = vadd.f32 %v724, %v772
    %v803 = vadd.f32 %v726, %v774
    %v804 = vadd.f32 %v728, %v776
    %v805 = vadd.f32 %v730, %v778
    %v806 = vadd.f32 %v732, %v780
    %v807 = vadd.f32 %v734, %v782
    %v808 = vadd.f32 %v736, %v784
    %v809 = vadd.f32 %v738, %v786
    %v810 = vadd.f32 %v740, %v788
    %v811 = vadd.f32 %v742, %v790
    %v812 = vadd.f32 %v744, %v792
    %v813 = vadd.f32 %v746, %v794
    %v814 = vadd.f32 %v748, %v796
    %v815 = vadd.f32 %v750, %v798
    %v816 = vadd.f32 %v752, %v800
    %v817 = vld [vmem:[#allocation2] sm:$0x1]
    %v818 = vsel %vm238, %v801, 0.0
    %v819 = vsel %vm239, %v802, 0.0
    %v820 = vsel %vm240, %v803, 0.0
    %v821 = vsel %vm241, %v804, 0.0
    %v822 = vsel %vm242, %v805, 0.0
    %v823 = vsel %vm243, %v806, 0.0
    %v824 = vsel %vm244, %v807, 0.0
    %v825 = vsel %vm245, %v808, 0.0
    %v826 = vsel %vm246, %v809, 0.0
    %v827 = vsel %vm247, %v810, 0.0
    %v828 = vsel %vm248, %v811, 0.0
    %v829 = vsel %vm249, %v812, 0.0
    %v830 = vsel %vm250, %v813, 0.0
    %v831 = vsel %vm251, %v814, 0.0
    %v832 = vsel %vm252, %v815, 0.0
    %v833 = vsel %vm253, %v816, 0.0
    %v834 = vadd.f32 %v818, %v819
    %v835 = vadd.f32 %v834, %v820
    %v836 = vadd.f32 %v835, %v821
    %v837 = vadd.f32 %v836, %v822
    %v838 = vadd.f32 %v837, %v823
    %v839 = vadd.f32 %v838, %v824
    %v840 = vadd.f32 %v839, %v825
    %v841 = vadd.f32 %v840, %v826
    %v842 = vadd.f32 %v841, %v827
    %v843 = vadd.f32 %v842, %v828
    %v844 = vadd.f32 %v843, %v829
    %v845 = vadd.f32 %v844, %v830
    %v846 = vadd.f32 %v845, %v831
    %v847 = vadd.f32 %v846, %v832
    %v848 = vadd.f32 %v847, %v833
    %v849 = vrot.slane %v848, 4
    %v850 = vadd.f32 %v848, %v849
    %v851 = vrot.slane %v850, 2
    %v852 = vadd.f32 %v850, %v851
    %v853 = vrot.slane %v852, 1
    %v854 = vadd.f32 %v852, %v853
    %v855 = vadd.f32 %v817, %v854
    %856 = vst [vmem:[#allocation2] sm:$0x1] %v855
    %v873 = vunpack.c.l.b16 %v270
    %v874 = vunpack.c.l.b16 %v271
    %v875 = vunpack.c.l.b16 %v272
    %v876 = vunpack.c.l.b16 %v273
    %v877 = vunpack.c.l.b16 %v274
    %v878 = vunpack.c.l.b16 %v275
    %v879 = vunpack.c.l.b16 %v276
    %v880 = vunpack.c.l.b16 %v277
    %v881 = vunpack.c.l.b16 %v278
    %v882 = vunpack.c.l.b16 %v279
    %v883 = vunpack.c.l.b16 %v280
    %v884 = vunpack.c.l.b16 %v281
    %v885 = vunpack.c.l.b16 %v282
    %v886 = vunpack.c.l.b16 %v283
    %v887 = vunpack.c.l.b16 %v284
    %v888 = vunpack.c.l.b16 %v285
    %v889 = vpack.c.b16 %v874, %v873
    %v890 = vpack.c.b16 %v876, %v875
    %v891 = vpack.c.b16 %v878, %v877
    %v892 = vpack.c.b16 %v880, %v879
    %v893 = vpack.c.b16 %v882, %v881
    %v894 = vpack.c.b16 %v884, %v883
    %v895 = vpack.c.b16 %v886, %v885
    %v896 = vpack.c.b16 %v888, %v887
    %v898 = vsel %vm398, %v889, 0
    %v901 = vsel %vm398, %v890, 0
    %v904 = vsel %vm398, %v891, 0
    %v907 = vsel %vm398, %v892, 0
    %v910 = vsel %vm398, %v893, 0
    %v913 = vsel %vm398, %v894, 0
    %v916 = vsel %vm398, %v895, 0
    %v919 = vsel %vm398, %v896, 0
    %921 = vmatprep.subr.bf16.mxu0 0
    %922 = vmatpush1.bf16.xpose.msra.mxu0 %v898
    %923 = vmatprep.subr.bf16.mxu0 0
    %924 = vmatpush1.bf16.xpose.msra.mxu0 %v901
    %925 = vmatprep.subr.bf16.mxu0 0
    %926 = vmatpush1.bf16.xpose.msra.mxu0 %v904
    %927 = vmatprep.subr.bf16.mxu0 0
    %928 = vmatpush1.bf16.xpose.msra.mxu0 %v907
    %929 = vmatprep.subr.bf16.mxu0 0
    %930 = vmatpush1.bf16.xpose.msra.mxu0 %v910
    %931 = vmatprep.subr.bf16.mxu0 0
    %932 = vmatpush1.bf16.xpose.msra.mxu0 %v913
    %933 = vmatprep.subr.bf16.mxu0 0
    %934 = vmatpush1.bf16.xpose.msra.mxu0 %v916
    %935 = vmatprep.subr.bf16.mxu0 0
    %936 = vmatpush1.bf16.xpose.msra.mxu0 %v919
    %937 = vmatprep.subr.bf16.mxu0 0
    %938 = vmatpush1.bf16.xpose.msra.mxu0 0
    %939 = vmatprep.subr.bf16.mxu0 0
    %940 = vmatpush1.bf16.xpose.msra.mxu0 0
    %941 = vmatprep.subr.bf16.mxu0 0
    %942 = vmatpush1.bf16.xpose.msra.mxu0 0
    %943 = vmatprep.subr.bf16.mxu0 0
    %944 = vmatpush1.bf16.xpose.msra.mxu0 0
    %945 = vmatprep.subr.bf16.mxu0 0
    %946 = vmatpush1.bf16.xpose.msra.mxu0 0
    %947 = vmatprep.subr.bf16.mxu0 0
    %948 = vmatpush1.bf16.xpose.msra.mxu0 0
    %949 = vmatprep.subr.bf16.mxu0 0
    %950 = vmatpush1.bf16.xpose.msra.mxu0 0
    %951 = vmatprep.subr.bf16.mxu0 0
    %952 = vmatpush1.bf16.xpose.msra.mxu0 0
    %953 = vmatprep.mubr.bf16.mxu0 0
    %954 = vmatmul.mubr.bf16.gmra.mrb[0].mxu0 %v585
    %v955 = vpop.f32.mrb[0].mxu0
    %v956 = vadd.f32 0.0, %v955
    %v957 = vpop.f32.mrb[0].mxu0
    %v958 = vpop.f32.mrb[0].mxu0
    %v959 = vadd.f32 0.0, %v958
    %v960 = vpop.f32.mrb[0].mxu0
    %961 = vmatprep.mubr.bf16.mxu0 0
    %962 = vmatmul.mubr.bf16.gmra.mrb[0].mxu0 %v588
    %v963 = vpop.f32.mrb[0].mxu0
    %v964 = vadd.f32 0.0, %v963
    %v965 = vpop.f32.mrb[0].mxu0
    %v966 = vpop.f32.mrb[0].mxu0
    %v967 = vadd.f32 0.0, %v966
    %v968 = vpop.f32.mrb[0].mxu0
    %969 = vmatprep.mubr.bf16.mxu0 0
    %970 = vmatmul.mubr.bf16.gmra.mrb[0].mxu0 %v591
    %v971 = vpop.f32.mrb[0].mxu0
    %v972 = vadd.f32 0.0, %v971
    %v973 = vpop.f32.mrb[0].mxu0
    %v974 = vpop.f32.mrb[0].mxu0
    %v975 = vadd.f32 0.0, %v974
    %v976 = vpop.f32.mrb[0].mxu0
    %977 = vmatprep.mubr.bf16.mxu0 0
    %978 = vmatmul.mubr.bf16.gmra.mrb[0].mxu0 %v594
    %v979 = vpop.f32.mrb[0].mxu0
    %v980 = vadd.f32 0.0, %v979
    %v981 = vpop.f32.mrb[0].mxu0
    %v982 = vpop.f32.mrb[0].mxu0
    %v983 = vadd.f32 0.0, %v982
    %v984 = vpop.f32.mrb[0].mxu0
    %985 = vmatprep.mubr.bf16.mxu0 0
    %986 = vmatmul.mubr.bf16.gmra.mrb[0].mxu0 %v597
    %v987 = vpop.f32.mrb[0].mxu0
    %v988 = vadd.f32 0.0, %v987
    %v989 = vpop.f32.mrb[0].mxu0
    %v990 = vpop.f32.mrb[0].mxu0
    %v991 = vadd.f32 0.0, %v990
    %v992 = vpop.f32.mrb[0].mxu0
    %993 = vmatprep.mubr.bf16.mxu0 0
    %994 = vmatmul.mubr.bf16.gmra.mrb[0].mxu0 %v600
    %v995 = vpop.f32.mrb[0].mxu0
    %v996 = vadd.f32 0.0, %v995
    %v997 = vpop.f32.mrb[0].mxu0
    %v998 = vpop.f32.mrb[0].mxu0
    %v999 = vadd.f32 0.0, %v998
    %v1000 = vpop.f32.mrb[0].mxu0
    %1001 = vmatprep.mubr.bf16.mxu0 0
    %1002 = vmatmul.mubr.bf16.gmra.mrb[0].mxu0 %v603
    %v1003 = vpop.f32.mrb[0].mxu0
    %v1004 = vadd.f32 0.0, %v1003
    %v1005 = vpop.f32.mrb[0].mxu0
    %v1006 = vpop.f32.mrb[0].mxu0
    %v1007 = vadd.f32 0.0, %v1006
    %v1008 = vpop.f32.mrb[0].mxu0
    %1009 = vmatprep.mubr.bf16.mxu0 0
    %1010 = vmatmul.mubr.bf16.gmra.mrb[0].mxu0 %v606
    %v1011 = vpop.f32.mrb[0].mxu0
    %v1012 = vadd.f32 0.0, %v1011
    %v1013 = vpop.f32.mrb[0].mxu0
    %v1014 = vpop.f32.mrb[0].mxu0
    %v1015 = vadd.f32 0.0, %v1014
    %v1016 = vpop.f32.mrb[0].mxu0
    %1017 = vdwg.mxu0
    %1018 = vmatprep.subr.bf16.mxu0 0
    %1019 = vmatpush1.bf16.xpose.msra.mxu0 %v898
    %1020 = vmatprep.subr.bf16.mxu0 0
    %1021 = vmatpush1.bf16.xpose.msra.mxu0 %v901
    %1022 = vmatprep.subr.bf16.mxu0 0
    %1023 = vmatpush1.bf16.xpose.msra.mxu0 %v904
    %1024 = vmatprep.subr.bf16.mxu0 0
    %1025 = vmatpush1.bf16.xpose.msra.mxu0 %v907
    %1026 = vmatprep.subr.bf16.mxu0 0
    %1027 = vmatpush1.bf16.xpose.msra.mxu0 %v910
    %1028 = vmatprep.subr.bf16.mxu0 0
    %1029 = vmatpush1.bf16.xpose.msra.mxu0 %v913
    %1030 = vmatprep.subr.bf16.mxu0 0
    %1031 = vmatpush1.bf16.xpose.msra.mxu0 %v916
    %1032 = vmatprep.subr.bf16.mxu0 0
    %1033 = vmatpush1.bf16.xpose.msra.mxu0 %v919
    %1034 = vmatprep.subr.bf16.mxu0 0
    %1035 = vmatpush1.bf16.xpose.msra.mxu0 0
    %1036 = vmatprep.subr.bf16.mxu0 0
    %1037 = vmatpush1.bf16.xpose.msra.mxu0 0
    %1038 = vmatprep.subr.bf16.mxu0 0
    %1039 = vmatpush1.bf16.xpose.msra.mxu0 0
    %1040 = vmatprep.subr.bf16.mxu0 0
    %1041 = vmatpush1.bf16.xpose.msra.mxu0 0
    %1042 = vmatprep.subr.bf16.mxu0 0
    %1043 = vmatpush1.bf16.xpose.msra.mxu0 0
    %1044 = vmatprep.subr.bf16.mxu0 0
    %1045 = vmatpush1.bf16.xpose.msra.mxu0 0
    %1046 = vmatprep.subr.bf16.mxu0 0
    %1047 = vmatpush1.bf16.xpose.msra.mxu0 0
    %1048 = vmatprep.subr.bf16.mxu0 0
    %1049 = vmatpush1.bf16.xpose.msra.mxu0 0
    %1050 = vmatprep.mubr.bf16.mxu0 0
    %1051 = vmatmul.mubr.bf16.gmra.mrb[0].mxu0 %v400
    %v1052 = vpop.f32.mrb[0].mxu0
    %v1053 = vadd.f32 0.0, %v1052
    %v1054 = vpop.f32.mrb[0].mxu0
    %v1055 = vpop.f32.mrb[0].mxu0
    %v1056 = vadd.f32 0.0, %v1055
    %v1057 = vpop.f32.mrb[0].mxu0
    %1058 = vmatprep.mubr.bf16.mxu0 0
    %1059 = vmatmul.mubr.bf16.gmra.mrb[0].mxu0 %v403
    %v1060 = vpop.f32.mrb[0].mxu0
    %v1061 = vadd.f32 0.0, %v1060
    %v1062 = vpop.f32.mrb[0].mxu0
    %v1063 = vpop.f32.mrb[0].mxu0
    %v1064 = vadd.f32 0.0, %v1063
    %v1065 = vpop.f32.mrb[0].mxu0
    %1066 = vmatprep.mubr.bf16.mxu0 0
    %1067 = vmatmul.mubr.bf16.gmra.mrb[0].mxu0 %v406
    %v1068 = vpop.f32.mrb[0].mxu0
    %v1069 = vadd.f32 0.0, %v1068
    %v1070 = vpop.f32.mrb[0].mxu0
    %v1071 = vpop.f32.mrb[0].mxu0
    %v1072 = vadd.f32 0.0, %v1071
    %v1073 = vpop.f32.mrb[0].mxu0
    %1074 = vmatprep.mubr.bf16.mxu0 0
    %1075 = vmatmul.mubr.bf16.gmra.mrb[0].mxu0 %v409
    %v1076 = vpop.f32.mrb[0].mxu0
    %v1077 = vadd.f32 0.0, %v1076
    %v1078 = vpop.f32.mrb[0].mxu0
    %v1079 = vpop.f32.mrb[0].mxu0
    %v1080 = vadd.f32 0.0, %v1079
    %v1081 = vpop.f32.mrb[0].mxu0
    %1082 = vmatprep.mubr.bf16.mxu0 0
    %1083 = vmatmul.mubr.bf16.gmra.mrb[0].mxu0 %v412
    %v1084 = vpop.f32.mrb[0].mxu0
    %v1085 = vadd.f32 0.0, %v1084
    %v1086 = vpop.f32.mrb[0].mxu0
    %v1087 = vpop.f32.mrb[0].mxu0
    %v1088 = vadd.f32 0.0, %v1087
    %v1089 = vpop.f32.mrb[0].mxu0
    %1090 = vmatprep.mubr.bf16.mxu0 0
    %1091 = vmatmul.mubr.bf16.gmra.mrb[0].mxu0 %v415
    %v1092 = vpop.f32.mrb[0].mxu0
    %v1093 = vadd.f32 0.0, %v1092
    %v1094 = vpop.f32.mrb[0].mxu0
    %v1095 = vpop.f32.mrb[0].mxu0
    %v1096 = vadd.f32 0.0, %v1095
    %v1097 = vpop.f32.mrb[0].mxu0
    %1098 = vmatprep.mubr.bf16.mxu0 0
    %1099 = vmatmul.mubr.bf16.gmra.mrb[0].mxu0 %v418
    %v1100 = vpop.f32.mrb[0].mxu0
    %v1101 = vadd.f32 0.0, %v1100
    %v1102 = vpop.f32.mrb[0].mxu0
    %v1103 = vpop.f32.mrb[0].mxu0
    %v1104 = vadd.f32 0.0, %v1103
    %v1105 = vpop.f32.mrb[0].mxu0
    %1106 = vmatprep.mubr.bf16.mxu0 0
    %1107 = vmatmul.mubr.bf16.gmra.mrb[0].mxu0 %v421
    %v1108 = vpop.f32.mrb[0].mxu0
    %v1109 = vadd.f32 0.0, %v1108
    %v1110 = vpop.f32.mrb[0].mxu0
    %v1111 = vpop.f32.mrb[0].mxu0
    %v1112 = vadd.f32 0.0, %v1111
    %v1113 = vpop.f32.mrb[0].mxu0
    %1114 = vdwg.mxu0
    %v1115 = vsub.f32 %v956, 2.0
    %v1116 = vsub.f32 %v959, 2.0
    %v1117 = vsub.f32 %v964, 2.0
    %v1118 = vsub.f32 %v967, 2.0
    %v1119 = vsub.f32 %v972, 2.0
    %v1120 = vsub.f32 %v975, 2.0
    %v1121 = vsub.f32 %v980, 2.0
    %v1122 = vsub.f32 %v983, 2.0
    %v1123 = vsub.f32 %v988, 2.0
    %v1124 = vsub.f32 %v991, 2.0
    %v1125 = vsub.f32 %v996, 2.0
    %v1126 = vsub.f32 %v999, 2.0
    %v1127 = vsub.f32 %v1004, 2.0
    %v1128 = vsub.f32 %v1007, 2.0
    %v1129 = vsub.f32 %v1012, 2.0
    %v1130 = vsub.f32 %v1015, 2.0
    %v1131 = vmul.f32 %v1115, 1.442695
    %v1132 = vpow.pop %v1131
    %v1133 = vmul.f32 %v1116, 1.442695
    %v1134 = vpow.pop %v1133
    %v1135 = vmul.f32 %v1117, 1.442695
    %v1136 = vpow.pop %v1135
    %v1137 = vmul.f32 %v1118, 1.442695
    %v1138 = vpow.pop %v1137
    %v1139 = vmul.f32 %v1119, 1.442695
    %v1140 = vpow.pop %v1139
    %v1141 = vmul.f32 %v1120, 1.442695
    %v1142 = vpow.pop %v1141
    %v1143 = vmul.f32 %v1121, 1.442695
    %v1144 = vpow.pop %v1143
    %v1145 = vmul.f32 %v1122, 1.442695
    %v1146 = vpow.pop %v1145
    %v1147 = vmul.f32 %v1123, 1.442695
    %v1148 = vpow.pop %v1147
    %v1149 = vmul.f32 %v1124, 1.442695
    %v1150 = vpow.pop %v1149
    %v1151 = vmul.f32 %v1125, 1.442695
    %v1152 = vpow.pop %v1151
    %v1153 = vmul.f32 %v1126, 1.442695
    %v1154 = vpow.pop %v1153
    %v1155 = vmul.f32 %v1127, 1.442695
    %v1156 = vpow.pop %v1155
    %v1157 = vmul.f32 %v1128, 1.442695
    %v1158 = vpow.pop %v1157
    %v1159 = vmul.f32 %v1129, 1.442695
    %v1160 = vpow.pop %v1159
    %v1161 = vmul.f32 %v1130, 1.442695
    %v1162 = vpow.pop %v1161
    %v1163 = vsub.f32 %v1053, 2.0
    %v1164 = vsub.f32 %v1056, 2.0
    %v1165 = vsub.f32 %v1061, 2.0
    %v1166 = vsub.f32 %v1064, 2.0
    %v1167 = vsub.f32 %v1069, 2.0
    %v1168 = vsub.f32 %v1072, 2.0
    %v1169 = vsub.f32 %v1077, 2.0
    %v1170 = vsub.f32 %v1080, 2.0
    %v1171 = vsub.f32 %v1085, 2.0
    %v1172 = vsub.f32 %v1088, 2.0
    %v1173 = vsub.f32 %v1093, 2.0
    %v1174 = vsub.f32 %v1096, 2.0
    %v1175 = vsub.f32 %v1101, 2.0
    %v1176 = vsub.f32 %v1104, 2.0
    %v1177 = vsub.f32 %v1109, 2.0
    %v1178 = vsub.f32 %v1112, 2.0
    %v1179 = vmul.f32 %v1163, 1.442695
    %v1180 = vpow.pop %v1179
    %v1181 = vmul.f32 %v1164, 1.442695
    %v1182 = vpow.pop %v1181
    %v1183 = vmul.f32 %v1165, 1.442695
    %v1184 = vpow.pop %v1183
    %v1185 = vmul.f32 %v1166, 1.442695
    %v1186 = vpow.pop %v1185
    %v1187 = vmul.f32 %v1167, 1.442695
    %v1188 = vpow.pop %v1187
    %v1189 = vmul.f32 %v1168, 1.442695
    %v1190 = vpow.pop %v1189
    %v1191 = vmul.f32 %v1169, 1.442695
    %v1192 = vpow.pop %v1191
    %v1193 = vmul.f32 %v1170, 1.442695
    %v1194 = vpow.pop %v1193
    %v1195 = vmul.f32 %v1171, 1.442695
    %v1196 = vpow.pop %v1195
    %v1197 = vmul.f32 %v1172, 1.442695
    %v1198 = vpow.pop %v1197
    %v1199 = vmul.f32 %v1173, 1.442695
    %v1200 = vpow.pop %v1199
    %v1201 = vmul.f32 %v1174, 1.442695
    %v1202 = vpow.pop %v1201
    %v1203 = vmul.f32 %v1175, 1.442695
    %v1204 = vpow.pop %v1203
    %v1205 = vmul.f32 %v1176, 1.442695
    %v1206 = vpow.pop %v1205
    %v1207 = vmul.f32 %v1177, 1.442695
    %v1208 = vpow.pop %v1207
    %v1209 = vmul.f32 %v1178, 1.442695
    %v1210 = vpow.pop %v1209
    %v1211 = vadd.f32 %v1132, %v1180
    %v1212 = vadd.f32 %v1134, %v1182
    %v1213 = vadd.f32 %v1136, %v1184
    %v1214 = vadd.f32 %v1138, %v1186
    %v1215 = vadd.f32 %v1140, %v1188
    %v1216 = vadd.f32 %v1142, %v1190
    %v1217 = vadd.f32 %v1144, %v1192
    %v1218 = vadd.f32 %v1146, %v1194
    %v1219 = vadd.f32 %v1148, %v1196
    %v1220 = vadd.f32 %v1150, %v1198
    %v1221 = vadd.f32 %v1152, %v1200
    %v1222 = vadd.f32 %v1154, %v1202
    %v1223 = vadd.f32 %v1156, %v1204
    %v1224 = vadd.f32 %v1158, %v1206
    %v1225 = vadd.f32 %v1160, %v1208
    %v1226 = vadd.f32 %v1162, %v1210
    %v1227 = vld [vmem:[#allocation3] sm:$0x1]
    %v1228 = vsel %vm238, %v1211, 0.0
    %v1229 = vsel %vm239, %v1212, 0.0
    %v1230 = vsel %vm240, %v1213, 0.0
    %v1231 = vsel %vm241, %v1214, 0.0
    %v1232 = vsel %vm242, %v1215, 0.0
    %v1233 = vsel %vm243, %v1216, 0.0
    %v1234 = vsel %vm244, %v1217, 0.0
    %v1235 = vsel %vm245, %v1218, 0.0
    %v1236 = vsel %vm246, %v1219, 0.0
    %v1237 = vsel %vm247, %v1220, 0.0
    %v1238 = vsel %vm248, %v1221, 0.0
    %v1239 = vsel %vm249, %v1222, 0.0
    %v1240 = vsel %vm250, %v1223, 0.0
    %v1241 = vsel %vm251, %v1224, 0.0
    %v1242 = vsel %vm252, %v1225, 0.0
    %v1243 = vsel %vm253, %v1226, 0.0
    %v1244 = vadd.f32 %v1228, %v1229
    %v1245 = vadd.f32 %v1244, %v1230
    %v1246 = vadd.f32 %v1245, %v1231
    %v1247 = vadd.f32 %v1246, %v1232
    %v1248 = vadd.f32 %v1247, %v1233
    %v1249 = vadd.f32 %v1248, %v1234
    %v1250 = vadd.f32 %v1249, %v1235
    %v1251 = vadd.f32 %v1250, %v1236
    %v1252 = vadd.f32 %v1251, %v1237
    %v1253 = vadd.f32 %v1252, %v1238
    %v1254 = vadd.f32 %v1253, %v1239
    %v1255 = vadd.f32 %v1254, %v1240
    %v1256 = vadd.f32 %v1255, %v1241
    %v1257 = vadd.f32 %v1256, %v1242
    %v1258 = vadd.f32 %v1257, %v1243
    %v1259 = vrot.slane %v1258, 4
    %v1260 = vadd.f32 %v1258, %v1259
    %v1261 = vrot.slane %v1260, 2
    %v1262 = vadd.f32 %v1260, %v1261
    %v1263 = vrot.slane %v1262, 1
    %v1264 = vadd.f32 %v1262, %v1263
    %v1265 = vadd.f32 %v1227, %v1264
    %1266 = vst [vmem:[#allocation3] sm:$0x1] %v1265
    // Predicated region
    $region38: #{tpu_custom_call.1} parent=1 // pred_check
      %p1267 = pneg %p31
    $region39: #{tpu_custom_call.1} parent=1 // pred_check_branch
      %1269 = sbr.rel (%p1267) target = $region41
    $region40: #{tpu_custom_call.1} parent=1 // pred_region
      %v1270 = vld [vmem:[%s7] sm:$0x1]
      %v1271 = vld [vmem:[#allocation2] sm:$0x1]
      %v1272 = vlog2.pop %v1271
      %v1273 = vmul.f32 %v1272, 0.6931472
      %v1274 = vadd.f32 %v1273, 2.0
      %v1275 = vsub.f32 %v1274, %v1270
      %v1276 = vld [vmem:[#allocation3] sm:$0x1]
      %v1277 = vlog2.pop %v1276
      %v1278 = vmul.f32 %v1277, 0.6931472
      %v1279 = vadd.f32 %v1278, 2.0
      %v1280 = vsub.f32 %v1279, %v1270
      %v1281 = vadd.f32 %v1275, %v1280
      %1282 = vst [vmem:[#allocation4] sm:$0x1] %v1281
    $region41: #{tpu_custom_call.1} parent=1 // pred_fallthru
      _
    // Predicated region
    $region42: #{tpu_custom_call.1} parent=1 // pred_check
      _
    $region43: #{tpu_custom_call.1} parent=1 // pred_check_branch
      %1284 = sbr.rel (0) target = $region45
    $region44: #{tpu_custom_call.1} parent=1 // pred_region
      %s1286 = ssub.s32 16, 16
      %1287 = vsyncadd [#allocation5], %s1286
      %s1289 = sshll.u32 [#allocation4], 4
      %s1290 = int_to_ptr.vmem [resolvable:$true] %s1289
      %1292 = dma.vmem_to_hbm [thread:$0]  %s1290, 16, %s8, [#allocation5]
    $region45: #{tpu_custom_call.1} parent=1 // pred_fallthru
      _
    // Predicated region
    $region46: #{tpu_custom_call.1} parent=1 // pred_check
      _
    $region47: #{tpu_custom_call.1} parent=1 // pred_check_branch
      %1294 = sbr.rel (0) target = $region49
    $region48: #{tpu_custom_call.1} parent=1 // pred_region
      %1295 = dma.done [#allocation5], 16
    $region49: #{tpu_custom_call.1} parent=1 // pred_fallthru
      _
    %1296 = vsyncpa [#allocation5], 1

</llo_original>
